<compile_context>
chip_gen: v5e
topology: v5e:2x2
jax: 0.10.0
libtpu: 0.0.40
codegen_flags: <defaults>
</compile_context>

<pallas_src>
import functools

import jax
import jax.numpy as jnp
from jax.experimental import pallas as pl
from jax.experimental.pallas import tpu as pltpu


def _round_up(n, m):
    return ((n + m - 1) // m) * m


def _fourier_kan_kernel(*refs, gridsize, addbias):
    if addbias:
        x_ref, h_ref, wc_ref, ws_ref, b_ref, o_ref = refs
    else:
        x_ref, h_ref, wc_ref, ws_ref, o_ref = refs
        b_ref = None

    x = x_ref[...]                                    # (tn, D) f32
    # Lane-replicate x to width F = D*G (ordering g*D + i): a cheap lane
    # concat instead of the old sparse (D, 2F) expansion matmul.
    xr = jnp.concatenate([x] * gridsize, axis=-1)     # (tn, F)
    ang = xr * h_ref[...]                             # (tn, F) f32, VPU
    c = jnp.cos(ang)                                  # EUP, f32
    s = jnp.sin(ang)                                  # EUP, f32
    # Two MXU matmuls with f32 accumulation; coefficient operands may be bf16.
    y = jnp.dot(c.astype(wc_ref.dtype), wc_ref[...],
                preferred_element_type=jnp.float32)
    y = y + jnp.dot(s.astype(ws_ref.dtype), ws_ref[...],
                    preferred_element_type=jnp.float32)
    if addbias:
        y = y + b_ref[...]
    o_ref[...] = y.astype(o_ref.dtype)


def _const_spec(shape, *, single_buffer):
    """BlockSpec for a grid-invariant operand (constant index_map)."""
    index_map = lambda i: (0,) * len(shape)
    if single_buffer:
        try:
            # Never changes across the grid -> one buffer is enough.
            return pl.BlockSpec(shape, index_map, pipeline_mode=pl.Buffered(1))
        except (TypeError, ValueError, AttributeError):
            pass  # fall back to default double buffering
    return pl.BlockSpec(shape, index_map)


def prepare_fourier_kan_params(fouriercoeffs, bias=None, *,
                               use_bf16_matmul=True):
    """One-time parameter rearrangement (hoisted out of the hot call path).

    fouriercoeffs: (2, outdim, inputdim, gridsize);  bias: (1, outdim) or None
    Returns (harm, wc, ws, bias2d) with
      harm[0, g*D + i] = g + 1
      wc[g*D + i, j]   = fouriercoeffs[0, j, i, g]
      ws[g*D + i, j]   = fouriercoeffs[1, j, i, g]
    """
    _, outdim, inputdim, gridsize = fouriercoeffs.shape
    F = inputdim * gridsize
    wdt = jnp.bfloat16 if use_bf16_matmul else jnp.float32
    fc = jnp.asarray(fouriercoeffs, jnp.float32)
    wc = jnp.transpose(fc[0], (2, 1, 0)).reshape(F, outdim).astype(wdt)
    ws = jnp.transpose(fc[1], (2, 1, 0)).reshape(F, outdim).astype(wdt)
    harm = jnp.repeat(jnp.arange(1, gridsize + 1, dtype=jnp.float32),
                      inputdim).reshape(1, F)
    b = None
    if bias is not None:
        b = jnp.asarray(bias, jnp.float32).reshape(1, outdim)
    return harm, wc, ws, b


@functools.partial(
    jax.jit,
    static_argnames=("addbias", "tile_n", "out_dtype",
                     "single_buffer_constants"))
def fourier_kan_forward(x, harm, wc, ws, bias=None, *, addbias=True,
                        tile_n=512, out_dtype=jnp.float32,
                        single_buffer_constants=True):
    """x: (..., inputdim) -> (..., outdim); params from prepare_fourier_kan_params."""
    assert tile_n % 8 == 0, "tile_n must be a multiple of 8"
    *lead, D = x.shape
    F = harm.shape[-1]
    gridsize = F // D
    assert gridsize * D == F, "harmonic row width must be inputdim*gridsize"
    outdim = wc.shape[-1]
    if addbias:
        assert bias is not None, "addbias=True requires a bias array"

    x2 = x.reshape(-1, D).astype(jnp.float32)
    N = x2.shape[0]

    # Row tile: tall by default (mem-bound v5e/v6e), clamped for small inputs,
    # and capped so the "parallel" row axis has >= 2 steps when enough rows
    # exist (v7x has 2 TensorCores to shard the row axis across).
    n8 = _round_up(max(N, 1), 8)
    tn = max(8, min(tile_n, n8))
    if tn >= n8 and n8 >= 16:
        tn = _round_up(n8 // 2, 8)
    n_pad = _round_up(N, tn)
    if n_pad != N:
        x2 = jnp.concatenate(
            [x2, jnp.zeros((n_pad - N, D), jnp.float32)], axis=0)

    out_bytes = jnp.dtype(out_dtype).itemsize
    w_bytes = jnp.dtype(wc.dtype).itemsize
    # Rough VMEM budget: double-buffered x/out blocks, single-buffered
    # constants, plus xr/ang/cos/sin temporaries; clamped to v7x's 64 MiB.
    est = (2 * tn * D * 4 + 2 * tn * outdim * out_bytes
           + 2 * F * outdim * w_bytes + (F + outdim) * 4
           + 6 * tn * F * 4)
    vmem_limit = int(min(max(2 * est, 32 << 20), 64 << 20))

    const = functools.partial(_const_spec,
                              single_buffer=single_buffer_constants)
    in_specs = [
        pl.BlockSpec((tn, D), lambda i: (i, 0)),  # x row tile
        const((1, F)),                            # harmonic row
        const((F, outdim)),                       # Wc
        const((F, outdim)),                       # Ws
    ]
    args = [x2, harm, wc, ws]
    if addbias:
        in_specs.append(const((1, outdim)))       # bias
        args.append(bias)

    kernel = functools.partial(_fourier_kan_kernel, gridsize=gridsize,
                               addbias=addbias)
    out = pl.pallas_call(
        kernel,
        out_shape=jax.ShapeDtypeStruct((n_pad, outdim), out_dtype),
        grid_spec=pltpu.PrefetchScalarGridSpec(
            num_scalar_prefetch=0,
            grid=(n_pad // tn,),
            in_specs=in_specs,
            out_specs=pl.BlockSpec((tn, outdim), lambda i: (i, 0)),
        ),
        compiler_params=pltpu.CompilerParams(
            dimension_semantics=("parallel",),
            vmem_limit_bytes=vmem_limit),
    )(*args)

    out = out[:N]
    return out.reshape(*lead, outdim)


def fourier_kan_reference(x, fouriercoeffs, bias, gridsize, addbias=True):
    """Pure-JAX reference mirroring the PyTorch forward."""
    *lead, D = x.shape
    x2 = x.reshape(-1, D)
    k = jnp.arange(1, gridsize + 1, dtype=jnp.float32).reshape(1, 1, 1,
                                                               gridsize)
    xr = x2.reshape(x2.shape[0], 1, x2.shape[1], 1)
    c = jnp.cos(k * xr)
    s = jnp.sin(k * xr)
    y = jnp.sum(c * fouriercoeffs[0:1], axis=(-2, -1))
    y = y + jnp.sum(s * fouriercoeffs[1:2], axis=(-2, -1))
    if addbias:
        y = y + bias
    return y.reshape(*lead, fouriercoeffs.shape[1])


if __name__ == "__main__":
    # Module config (small, consistent with the layer's forward semantics).
    inputdim, outdim, gridsize = 8, 16, 5
    batch, seq = 2, 9   # N = 18 rows: exercises padding + a 2-step grid

    key = jax.random.PRNGKey(0)
    kx, kw, kb = jax.random.split(key, 3)

    # Deterministic init mirroring __init__ (smooth_initialization=True).
    grid_norm = (jnp.arange(gridsize, dtype=jnp.float32) + 1.0) ** 2
    fouriercoeffs = (jax.random.normal(kw, (2, outdim, inputdim, gridsize),
                                       dtype=jnp.float32)
                     / (jnp.sqrt(jnp.float32(inputdim)) * grid_norm))
    # Module initializes bias to zeros; use a nonzero bias so the bias-add
    # path is exercised numerically.
    bias = 0.1 * jax.random.normal(kb, (1, outdim), dtype=jnp.float32)

    x = jax.random.normal(kx, (batch, seq, inputdim), dtype=jnp.float32)

    y_ref = fourier_kan_reference(x, fouriercoeffs, bias, gridsize,
                                  addbias=True)
    y_ref_nb = fourier_kan_reference(x, fouriercoeffs, bias, gridsize,
                                     addbias=False)

    # One-time parameter prep (hoisted out of the hot path).
    harm, wc_bf16, ws_bf16, b2d = prepare_fourier_kan_params(
        fouriercoeffs, bias, use_bf16_matmul=True)
    harm32, wc_f32, ws_f32, _ = prepare_fourier_kan_params(
        fouriercoeffs, bias, use_bf16_matmul=False)

    # Default fast path: bf16 coefficient matmuls, f32 angles/accumulation.
    y_fast = fourier_kan_forward(x, harm, wc_bf16, ws_bf16, b2d, addbias=True)
    y_fast = jax.block_until_ready(y_fast)
    assert y_fast.shape == (batch, seq, outdim)
    assert jnp.allclose(y_fast, y_ref, atol=2e-2, rtol=2e-2), \
        "bf16-matmul path mismatch vs reference"

    # Full-f32 path: tight tolerance (also validates the g*D+i ordering).
    y_f32 = fourier_kan_forward(x, harm32, wc_f32, ws_f32, b2d, addbias=True)
    y_f32 = jax.block_until_ready(y_f32)
    assert jnp.allclose(y_f32, y_ref, atol=1e-4, rtol=1e-4), \
        "f32 path mismatch vs reference"

    # Small tile + default-double-buffered constants: exercises a 3-step grid,
    # row padding (18 -> 24) and the non-Buffered spec path.
    y_small = fourier_kan_forward(x, harm32, wc_f32, ws_f32, b2d,
                                  addbias=True, tile_n=8,
                                  single_buffer_constants=False)
    y_small = jax.block_until_ready(y_small)
    assert jnp.allclose(y_small, y_ref, atol=1e-4, rtol=1e-4), \
        "small-tile path mismatch vs reference"

    # addbias=False path (bias operand dropped entirely).
    y_nb = fourier_kan_forward(x, harm32, wc_f32, ws_f32, None, addbias=False)
    y_nb = jax.block_until_ready(y_nb)
    assert jnp.allclose(y_nb, y_ref_nb, atol=1e-4, rtol=1e-4), \
        "addbias=False path mismatch vs reference"

    # bf16-output option (halves output HBM traffic on mem-bound v5e/v6e).
    y_bf16_out = fourier_kan_forward(x, harm32, wc_f32, ws_f32, b2d,
                                     addbias=True, out_dtype=jnp.bfloat16)
    y_bf16_out = jax.block_until_ready(y_bf16_out)
    assert y_bf16_out.dtype == jnp.bfloat16
    assert jnp.allclose(y_bf16_out.astype(jnp.float32), y_ref,
                        atol=2e-2, rtol=2e-2), \
        "bf16-output path mismatch vs reference"

    print("KERNEL_OK")
</pallas_src>

<mosaic_0001>
module attributes {stable_mosaic.version = 11 : i64} {
  func.func @_fourier_kan_kernel(%arg0: i32, %arg1: memref<16x8xf32, #tpu.memory_space<vmem>>, %arg2: memref<1x40xf32, #tpu.memory_space<vmem>>, %arg3: memref<40x16xbf16, #tpu.memory_space<vmem>>, %arg4: memref<40x16xbf16, #tpu.memory_space<vmem>>, %arg5: memref<1x16xf32, #tpu.memory_space<vmem>>, %arg6: memref<16x16xf32, #tpu.memory_space<vmem>>) attributes {dimension_semantics = [#tpu.dimension_semantics<parallel>], iteration_bounds = array<i64: 2>, scalar_prefetch = 0 : i64, scratch_operands = 0 : i64, tpu.core_type = #tpu.core_type<tc>, window_params = [{transform_indices = @transform_0, window_bounds = array<i64: 16, 8>}, {pipeline_mode = #tpu.pipeline_mode<synchronous>, transform_indices = @transform_1, window_bounds = array<i64: 1, 40>}, {pipeline_mode = #tpu.pipeline_mode<synchronous>, transform_indices = @transform_2, window_bounds = array<i64: 40, 16>}, {pipeline_mode = #tpu.pipeline_mode<synchronous>, transform_indices = @transform_3, window_bounds = array<i64: 40, 16>}, {pipeline_mode = #tpu.pipeline_mode<synchronous>, transform_indices = @transform_4, window_bounds = array<i64: 1, 16>}, {transform_indices = @transform_5, window_bounds = array<i64: 16, 16>}]} {
    %c0 = arith.constant 0 : index
    %c0_0 = arith.constant 0 : index
    %0 = vector.load %arg1[%c0, %c0_0] : memref<16x8xf32, #tpu.memory_space<vmem>>, vector<16x8xf32>
    %1 = tpu.concatenate %0, %0, %0, %0, %0 in 1 : vector<16x8xf32>, vector<16x8xf32>, vector<16x8xf32>, vector<16x8xf32>, vector<16x8xf32> -> vector<16x40xf32>
    %c0_1 = arith.constant 0 : index
    %c0_2 = arith.constant 0 : index
    %2 = vector.load %arg2[%c0_1, %c0_2] : memref<1x40xf32, #tpu.memory_space<vmem>>, vector<1x40xf32>
    %3 = vector.broadcast %2 : vector<1x40xf32> to vector<16x40xf32>
    %4 = arith.mulf %1, %3 : vector<16x40xf32>
    %5 = math.cos %4 : vector<16x40xf32>
    %6 = math.sin %4 : vector<16x40xf32>
    %7 = arith.truncf %5 : vector<16x40xf32> to vector<16x40xbf16>
    %c0_3 = arith.constant 0 : index
    %c0_4 = arith.constant 0 : index
    %8 = vector.load %arg3[%c0_3, %c0_4] : memref<40x16xbf16, #tpu.memory_space<vmem>>, vector<40x16xbf16>
    %cst = arith.constant dense<0.000000e+00> : vector<16x16xf32>
    %9 = tpu.matmul %7, %8, %cst {dimension_numbers = #tpu.dot_dimension_numbers<[1], [0], [0], [1], [0, 0, 1, 1], [], []>} : vector<16x40xbf16>, vector<40x16xbf16>, vector<16x16xf32> -> vector<16x16xf32>
    %10 = arith.truncf %6 : vector<16x40xf32> to vector<16x40xbf16>
    %c0_5 = arith.constant 0 : index
    %c0_6 = arith.constant 0 : index
    %11 = vector.load %arg4[%c0_5, %c0_6] : memref<40x16xbf16, #tpu.memory_space<vmem>>, vector<40x16xbf16>
    %cst_7 = arith.constant dense<0.000000e+00> : vector<16x16xf32>
    %12 = tpu.matmul %10, %11, %cst_7 {dimension_numbers = #tpu.dot_dimension_numbers<[1], [0], [0], [1], [0, 0, 1, 1], [], []>} : vector<16x40xbf16>, vector<40x16xbf16>, vector<16x16xf32> -> vector<16x16xf32>
    %13 = arith.addf %9, %12 : vector<16x16xf32>
    %c0_8 = arith.constant 0 : index
    %c0_9 = arith.constant 0 : index
    %14 = vector.load %arg5[%c0_8, %c0_9] : memref<1x16xf32, #tpu.memory_space<vmem>>, vector<1x16xf32>
    %15 = vector.broadcast %14 : vector<1x16xf32> to vector<16x16xf32>
    %16 = arith.addf %13, %15 : vector<16x16xf32>
    %c0_10 = arith.constant 0 : index
    %c0_11 = arith.constant 0 : index
    %17 = vector.load %arg6[%c0_10, %c0_11] : memref<16x16xf32, #tpu.memory_space<vmem>>, vector<16x16xf32>
    tpu.vector_store %arg6[%c0_10, %c0_11], %16 {strides = array<i32>} : memref<16x16xf32, #tpu.memory_space<vmem>>, vector<16x16xf32>,
    return
  }
  func.func @transform_0(%arg0: i32) -> (i32, i32) {
    %c0_i32 = arith.constant 0 : i32
    %c0_i32_0 = arith.constant 0 : i32
    return %arg0, %c0_i32 : i32, i32
  }
  func.func @transform_1(%arg0: i32) -> (i32, i32) {
    %c0_i32 = arith.constant 0 : i32
    %c0_i32_0 = arith.constant 0 : i32
    %c0_i32_1 = arith.constant 0 : i32
    return %c0_i32, %c0_i32_0 : i32, i32
  }
  func.func @transform_2(%arg0: i32) -> (i32, i32) {
    %c0_i32 = arith.constant 0 : i32
    %c0_i32_0 = arith.constant 0 : i32
    %c0_i32_1 = arith.constant 0 : i32
    return %c0_i32, %c0_i32_0 : i32, i32
  }
  func.func @transform_3(%arg0: i32) -> (i32, i32) {
    %c0_i32 = arith.constant 0 : i32
    %c0_i32_0 = arith.constant 0 : i32
    %c0_i32_1 = arith.constant 0 : i32
    return %c0_i32, %c0_i32_0 : i32, i32
  }
  func.func @transform_4(%arg0: i32) -> (i32, i32) {
    %c0_i32 = arith.constant 0 : i32
    %c0_i32_0 = arith.constant 0 : i32
    %c0_i32_1 = arith.constant 0 : i32
    return %c0_i32, %c0_i32_0 : i32, i32
  }
  func.func @transform_5(%arg0: i32) -> (i32, i32) {
    %c0_i32 = arith.constant 0 : i32
    %c0_i32_0 = arith.constant 0 : i32
    return %arg0, %c0_i32 : i32, i32
  }
}

</mosaic_0001>

<llo_original>
// kernel: fourier_kan_forward.1
$region0: #{fourier_kan_forward.1}
  #allocation0 [shape = 'u32[]', space=smem, size = 0x4, offset = 0x4, fixed_abs, tag = 'smem constant byte address 0x4 - core index']
  #allocation1 [shape = 'u32[72,128]{1,0:T(1,128)}', space=vmem, size = 0x9000, scoped, tag = 'internal scratch']
  %s0 = inlined_call_operand.vmem [shape: f32[32,8], index: 0, kind: input, shape index: {}]
  %s1 = inlined_call_operand.vmem [shape: f32[1,40], index: 1, kind: input, shape index: {}]
  %s2 = inlined_call_operand.vmem [shape: bf16[40,16], index: 2, kind: input, shape index: {}]
  %s3 = inlined_call_operand.vmem [shape: bf16[40,16], index: 3, kind: input, shape index: {}]
  %s4 = inlined_call_operand.vmem [shape: f32[1,16], index: 4, kind: input, shape index: {}]
  %s5 = inlined_call_operand.vmem [shape: f32[32,16], index: 5, kind: output, shape index: {}]
  %s6 = sld [smem:[#allocation0]]
  $region53: #{fourier_kan_forward.1} parent=0
    _
  %s8 = ssub.s32 1, %s6
  %s9 = scalar_select 0, %s8, %s6
  loop: start=0, step=1, limit=4
  $region2: #{fourier_kan_forward.1} parent=0 // loop_pre_header
    _
  $region3: #{fourier_kan_forward.1} parent=0 // loop_header
    %s11 = sphi 0, %s15
    %p12 = scmp.ge.s32.totalorder %s11, 4
    %s21 = sphi 0, %s23
    %s24 = sphi 0, %s21
    %s25 = sphi 0, %s24
    %s41 = sphi 0, %s25
    %s45 = sphi 0, %s45
    %s47 = sphi 0, %s45
    %s48 = sphi 0, %s47
    %s62 = sphi 0, %s48
    %s66 = sphi 0, %s66
    %s68 = sphi 0, %s66
    %s69 = sphi 0, %s68
    %s83 = sphi 0, %s69
    %s87 = sphi 0, %s87
    %s89 = sphi 0, %s87
    %s90 = sphi 0, %s89
    %s104 = sphi 0, %s90
    %s108 = sphi 0, %s108
    %s110 = sphi 0, %s108
    %s111 = sphi 0, %s110
    %s125 = sphi 0, %s111
    %s131 = sphi 0, %s133
    %s134 = sphi 0, %s131
    %s135 = sphi 0, %s134
    %s151 = sphi 0, %s135
  $region4: #{fourier_kan_forward.1} parent=0 // loop_header_branch
    %14 = sbr.rel (%p12) target = $region8
  $region5: #{fourier_kan_forward.1} parent=0 // loop_body
    %s16 = ssub.s32 %s11, 1
    %s17 = ssub.s32 %s11, 2
    %s18 = sadd.s32 %s11, 1
    %s19 = ssub.s32 %s11, %s18
    %p20 = scmp.eq.s32.totalorder %s19, 0
    %s22 = sadd.s32 %s21, 1
    %s23 = scalar_select %p20, %s21, %s22
    %p26 = pneg %p20
    %p27 = scmp.eq.s32.totalorder %s11, 1
    %p28 = por %p26, %p27
    %p29 = scmp.ne.s32.totalorder %s21, %s24
    %p30 = scmp.eq.s32.totalorder %s11, 0
    %p31 = por %p29, %p30
    %p32 = scmp.ne.s32.totalorder %s21, %s24
    %p33 = scmp.eq.s32.totalorder %s16, 1
    %p34 = por %p32, %p33
    %p35 = scmp.ne.s32.totalorder %s24, %s25
    %p36 = scmp.eq.s32.totalorder %s16, 0
    %p37 = por %p35, %p36
    %p38 = scmp.ne.s32.totalorder %s24, %s25
    %p39 = scmp.eq.s32.totalorder %s17, 1
    %p40 = por %p38, %p39
    %p42 = scmp.ne.s32.totalorder %s25, %s41
    %p43 = scmp.eq.s32.totalorder %s17, 0
    %p44 = por %p42, %p43
    %s46 = sadd.s32 %s45, 1
    %p49 = scmp.eq.s32.totalorder %s11, 1
    %p50 = scmp.ne.s32.totalorder %s45, %s47
    %p51 = scmp.eq.s32.totalorder %s11, 0
    %p52 = por %p50, %p51
    %p53 = scmp.ne.s32.totalorder %s45, %s47
    %p54 = scmp.eq.s32.totalorder %s16, 1
    %p55 = por %p53, %p54
    %p56 = scmp.ne.s32.totalorder %s47, %s48
    %p57 = scmp.eq.s32.totalorder %s16, 0
    %p58 = por %p56, %p57
    %p59 = scmp.ne.s32.totalorder %s47, %s48
    %p60 = scmp.eq.s32.totalorder %s17, 1
    %p61 = por %p59, %p60
    %p63 = scmp.ne.s32.totalorder %s48, %s62
    %p64 = scmp.eq.s32.totalorder %s17, 0
    %p65 = por %p63, %p64
    %s67 = sadd.s32 %s66, 1
    %p70 = scmp.eq.s32.totalorder %s11, 1
    %p71 = scmp.ne.s32.totalorder %s66, %s68
    %p72 = scmp.eq.s32.totalorder %s11, 0
    %p73 = por %p71, %p72
    %p74 = scmp.ne.s32.totalorder %s66, %s68
    %p75 = scmp.eq.s32.totalorder %s16, 1
    %p76 = por %p74, %p75
    %p77 = scmp.ne.s32.totalorder %s68, %s69
    %p78 = scmp.eq.s32.totalorder %s16, 0
    %p79 = por %p77, %p78
    %p80 = scmp.ne.s32.totalorder %s68, %s69
    %p81 = scmp.eq.s32.totalorder %s17, 1
    %p82 = por %p80, %p81
    %p84 = scmp.ne.s32.totalorder %s69, %s83
    %p85 = scmp.eq.s32.totalorder %s17, 0
    %p86 = por %p84, %p85
    %s88 = sadd.s32 %s87, 1
    %p91 = scmp.eq.s32.totalorder %s11, 1
    %p92 = scmp.ne.s32.totalorder %s87, %s89
    %p93 = scmp.eq.s32.totalorder %s11, 0
    %p94 = por %p92, %p93
    %p95 = scmp.ne.s32.totalorder %s87, %s89
    %p96 = scmp.eq.s32.totalorder %s16, 1
    %p97 = por %p95, %p96
    %p98 = scmp.ne.s32.totalorder %s89, %s90
    %p99 = scmp.eq.s32.totalorder %s16, 0
    %p100 = por %p98, %p99
    %p101 = scmp.ne.s32.totalorder %s89, %s90
    %p102 = scmp.eq.s32.totalorder %s17, 1
    %p103 = por %p101, %p102
    %p105 = scmp.ne.s32.totalorder %s90, %s104
    %p106 = scmp.eq.s32.totalorder %s17, 0
    %p107 = por %p105, %p106
    %s109 = sadd.s32 %s108, 1
    %p112 = scmp.eq.s32.totalorder %s11, 1
    %p113 = scmp.ne.s32.totalorder %s108, %s110
    %p114 = scmp.eq.s32.totalorder %s11, 0
    %p115 = por %p113, %p114
    %p116 = scmp.ne.s32.totalorder %s108, %s110
    %p117 = scmp.eq.s32.totalorder %s16, 1
    %p118 = por %p116, %p117
    %p119 = scmp.ne.s32.totalorder %s110, %s111
    %p120 = scmp.eq.s32.totalorder %s16, 0
    %p121 = por %p119, %p120
    %p122 = scmp.ne.s32.totalorder %s110, %s111
    %p123 = scmp.eq.s32.totalorder %s17, 1
    %p124 = por %p122, %p123
    %p126 = scmp.ne.s32.totalorder %s111, %s125
    %p127 = scmp.eq.s32.totalorder %s17, 0
    %p128 = por %p126, %p127
    %s129 = ssub.s32 %s11, %s18
    %p130 = scmp.eq.s32.totalorder %s129, 0
    %s132 = sadd.s32 %s131, 1
    %s133 = scalar_select %p130, %s131, %s132
    %p136 = pneg %p130
    %p137 = scmp.eq.s32.totalorder %s11, 1
    %p138 = por %p136, %p137
    %p139 = scmp.ne.s32.totalorder %s131, %s134
    %p140 = scmp.eq.s32.totalorder %s11, 0
    %p141 = por %p139, %p140
    %p142 = scmp.ne.s32.totalorder %s131, %s134
    %p143 = scmp.eq.s32.totalorder %s16, 1
    %p144 = por %p142, %p143
    %p145 = scmp.ne.s32.totalorder %s134, %s135
    %p146 = scmp.eq.s32.totalorder %s16, 0
    %p147 = por %p145, %p146
    %p148 = scmp.ne.s32.totalorder %s134, %s135
    %p149 = scmp.eq.s32.totalorder %s17, 1
    %p150 = por %p148, %p149
    %p152 = scmp.ne.s32.totalorder %s135, %s151
    %p153 = scmp.eq.s32.totalorder %s17, 0
    %p154 = por %p152, %p153
    %p155 = scmp.le.s32.totalorder 1, %s11
    %p156 = scmp.lt.s32.totalorder %s11, 3
    %p157 = pnand %p155, %p156
    %p158 = pneg %p157
    // Predicated region
    $region9: #{fourier_kan_forward.1} parent=5 // pred_check
      _
    $region10: #{fourier_kan_forward.1} parent=5 // pred_check_branch
      %160 = sbr.rel (%p157) target = $region12
    $region11: #{fourier_kan_forward.1} parent=5 // pred_region
      %s161 = ssub.s32 %s11, 1
      // Predicated region
      $region13: #{fourier_kan_forward.1} parent=11 // pred_check
        %p162 = pneg %p58
      $region14: #{fourier_kan_forward.1} parent=11 // pred_check_branch
        %164 = sbr.rel (%p162) target = $region16
      $region15: #{fourier_kan_forward.1} parent=11 // pred_region
        _
      $region16: #{fourier_kan_forward.1} parent=11 // pred_fallthru
        _
      // Predicated region
      $region17: #{fourier_kan_forward.1} parent=11 // pred_check
        %p165 = pneg %p79
      $region18: #{fourier_kan_forward.1} parent=11 // pred_check_branch
        %167 = sbr.rel (%p165) target = $region20
      $region19: #{fourier_kan_forward.1} parent=11 // pred_region
        _
      $region20: #{fourier_kan_forward.1} parent=11 // pred_fallthru
        _
      // Predicated region
      $region21: #{fourier_kan_forward.1} parent=11 // pred_check
        %p168 = pneg %p100
      $region22: #{fourier_kan_forward.1} parent=11 // pred_check_branch
        %170 = sbr.rel (%p168) target = $region24
      $region23: #{fourier_kan_forward.1} parent=11 // pred_region
        _
      $region24: #{fourier_kan_forward.1} parent=11 // pred_fallthru
        _
      // Predicated region
      $region25: #{fourier_kan_forward.1} parent=11 // pred_check
        %p171 = pneg %p121
      $region26: #{fourier_kan_forward.1} parent=11 // pred_check_branch
        %173 = sbr.rel (%p171) target = $region28
      $region27: #{fourier_kan_forward.1} parent=11 // pred_region
        _
      $region28: #{fourier_kan_forward.1} parent=11 // pred_fallthru
        _
    $region12: #{fourier_kan_forward.1} parent=5 // pred_fallthru
      _
    %p174 = scmp.lt.s32.totalorder %s11, 2
    // Predicated region
    $region29: #{fourier_kan_forward.1} parent=5 // pred_check
      %p175 = pneg %p174
    $region30: #{fourier_kan_forward.1} parent=5 // pred_check_branch
      %177 = sbr.rel (%p175) target = $region32
    $region31: #{fourier_kan_forward.1} parent=5 // pred_region
      // Predicated region
      $region33: #{fourier_kan_forward.1} parent=31 // pred_check
        %p178 = pneg %p31
      $region34: #{fourier_kan_forward.1} parent=31 // pred_check_branch
        %180 = sbr.rel (%p178) target = $region36
      $region35: #{fourier_kan_forward.1} parent=31 // pred_region
        %s181 = smul.u32 2, %s11
        %p182 = scmp.lt.s32.totalorder %s181, 3
        %s183 = scalar_select %p182, %s181, 3
        %s184 = smul.addr %s183, 8
        %s185 = scalar_lea.vmem %s0, %s184
        %s186 = smul.u32 2, %s11
      $region36: #{fourier_kan_forward.1} parent=31 // pred_fallthru
        _
    $region32: #{fourier_kan_forward.1} parent=5 // pred_fallthru
      _
    %p187 = scmp.le.s32.totalorder 1, %s11
    %p188 = scmp.lt.s32.totalorder %s11, 3
    %p189 = pnand %p187, %p188
    %p190 = pneg %p189
    // Predicated region
    $region37: #{fourier_kan_forward.1} parent=5 // pred_check
      _
    $region38: #{fourier_kan_forward.1} parent=5 // pred_check_branch
      %192 = sbr.rel (%p189) target = $region40
    $region39: #{fourier_kan_forward.1} parent=5 // pred_region
      %s193 = ssub.s32 %s11, 1
      %s194 = smul.u32 2, %s16
      %p195 = scmp.lt.s32.totalorder %s194, 3
      %s196 = scalar_select %p195, %s194, 3
      %s197 = smul.addr %s196, 8
      %s198 = scalar_lea.vmem %s0, %s197
      %p199 = pneg %p37
      %p200 = pneg %p34
      %p201 = pneg %p58
      %p202 = pneg %p55
      %p203 = pneg %p79
      %p204 = pneg %p76
      %p205 = pneg %p100
      %p206 = pneg %p97
      %p207 = pneg %p121
      %p208 = pneg %p118
      %p209 = pneg %p147
      %p210 = pneg %p144
      %s211 = smul.u32 2, %s16
      %p212 = scmp.lt.s32.totalorder %s211, 3
      %s213 = scalar_select %p212, %s211, 3
      %s214 = smul.addr %s213, 8
      %s215 = scalar_lea.vmem %s5, %s214
      %s216 = smul.u32 2, %s16
      %p217 = scmp.lt.s32.totalorder %s216, 3
      %s218 = scalar_select %p217, %s216, 3
      %s219 = smul.addr %s218, 8
      %s220 = scalar_lea.vmem %s0, %s219
      %s221 = smul.u32 2, %s16
      %s222 = smul.u32 2, %s16
      %p223 = scmp.lt.s32.totalorder %s222, 3
      %s224 = scalar_select %p223, %s222, 3
      %s225 = smul.addr %s224, 8
      %s226 = scalar_lea.vmem %s5, %s225
      %s227 = smul.u32 2, %s16
      %v229 = vld [vmem:[%s220] sm:$0xff]
      %v230 = vld [vmem:[%s220 + $0x8] sm:$0xff]
      %233 = vrot.lane.b32.xlu0 %v229, 8
      %v234 = vpop.permute.xlu0 %233
      %235 = vrot.lane.b32.xlu0 %v230, 8
      %v236 = vpop.permute.xlu0 %235
      %239 = vrot.lane.b32.xlu0 %v229, 16
      %v240 = vpop.permute.xlu0 %239
      %241 = vrot.lane.b32.xlu0 %v230, 16
      %v242 = vpop.permute.xlu0 %241
      %245 = vrot.lane.b32.xlu0 %v229, 24
      %v246 = vpop.permute.xlu0 %245
      %247 = vrot.lane.b32.xlu0 %v230, 24
      %v248 = vpop.permute.xlu0 %247
      %251 = vrot.lane.b32.xlu0 %v229, 32
      %v252 = vpop.permute.xlu0 %251
      %253 = vrot.lane.b32.xlu0 %v230, 32
      %v254 = vpop.permute.xlu0 %253
      %vm257 = vcmask 64512
      %v258 = vsel %vm257, %v229, %v234
      %v259 = vsel %vm257, %v230, %v236
      %vm260 = vcmask 130048
      %v261 = vsel %vm260, %v258, %v240
      %v262 = vsel %vm260, %v259, %v242
      %vm263 = vcmask 195584
      %v264 = vsel %vm263, %v261, %v246
      %v265 = vsel %vm263, %v262, %v248
      %vm266 = vcmask 261120
      %v267 = vsel %vm266, %v264, %v252
      %v268 = vsel %vm266, %v265, %v254
      %v269 = vld [vmem:[%s1] sm:$0x1]
      %v271 = vperm.slane %v269, 0
      %v273 = vmul.f32 %v267, %v271
      %v274 = vmul.f32 %v268, %v271
      %v275 = vand.u32 2147483647, %v273
      %vm276 = vcmp.le.f32.partialorder %v275, 0.7853982
      %vm277 = vcmp.lt.s32.totalorder %v273, 0
      %v278 = vand.u32 %v273, 2139095040
      %v279 = vshrl.u32 %v278, 23
      %v280 = vsub.s32 %v279, 127
      %v281 = vand.u32 2147483647, %v273
      %v282 = vand.u32 %v281, 8388607
      %v283 = vor.u32 %v282, 8388608
      %v284 = vsub.s32 0, %v283
      %v285 = vadd.s32 %v280, 1
      %vm286 = vcmp.gt.s32.totalorder %v285, 0
      %v287 = vsel %vm286, %v285, 0
      %v288 = vshrl.u32 %v287, 5
      %v289 = vand.u32 %v287, 31
      %v290 = vsub.s32 32, %v289
      %v291 = vshrl.u32 683565275, %v290
      %v292 = vshll.u32 683565275, %v289
      %v293 = vshrl.u32 2475754826, %v290
      %v294 = vor.u32 %v292, %v293
      %v295 = vshll.u32 2475754826, %v289
      %v296 = vshrl.u32 2131351028, %v290
      %v297 = vor.u32 %v295, %v296
      %v298 = vshll.u32 2131351028, %v289
      %v299 = vshrl.u32 2102212464, %v290
      %v300 = vor.u32 %v298, %v299
      %v301 = vshll.u32 2102212464, %v289
      %v302 = vshrl.u32 920167782, %v290
      %v303 = vor.u32 %v301, %v302
      %v304 = vshll.u32 920167782, %v289
      %v305 = vshrl.u32 1326507024, %v290
      %v306 = vor.u32 %v304, %v305
      %vm307 = vcmp.lt.s32.totalorder %v288, 1
      %vm308 = vcmp.lt.s32.totalorder %v288, 2
      %vm309 = vcmp.lt.s32.totalorder %v288, 3
      %vm310 = vcmp.lt.s32.totalorder %v288, 4
      %v311 = vsel %vm307, %v291, %v294
      %v312 = vsel %vm310, %v300, 2102212464
      %v313 = vsel %vm309, %v297, %v312
      %v314 = vsel %vm308, %v311, %v313
      %v315 = vsel %vm307, %v294, %v297
      %v316 = vsel %vm310, %v303, 920167782
      %v317 = vsel %vm309, %v300, %v316
      %v318 = vsel %vm308, %v315, %v317
      %v319 = vsel %vm307, %v297, %v300
      %v320 = vsel %vm310, %v306, 1326507024
      %v321 = vsel %vm309, %v303, %v320
      %v322 = vsel %vm308, %v319, %v321
      %v323 = vshll.u32 %v283, 8
      %v324 = vand.u32 %v323, 65535
      %v325 = vshrl.u32 %v323, 16
      %v326 = vand.u32 %v322, 65535
      %v327 = vshrl.u32 %v322, 16
      %v328 = vmul.u32 %v324, %v326
      %v329 = vmul.u32 %v324, %v327
      %v330 = vmul.u32 %v325, %v326
      %v331 = vmul.u32 %v325, %v327
      %v332 = vshll.u32 %v329, 16
      %v333 = vshrl.u32 %v329, 16
      %v334 = vshll.u32 %v330, 16
      %v335 = vshrl.u32 %v330, 16
      %vm336 = vc.u32 %v328, %v332
      %v337 = vsel %vm336, 1, 0
      %v338 = vadd.s32 %v328, %v332
      %v339 = vadd.s32 %v331, %v337
      %vm340 = vc.u32 %v338, %v334
      %v341 = vsel %vm340, 1, 0
      %v342 = vadd.s32 %v338, %v334
      %v343 = vadd.s32 %v339, %v341
      %v344 = vadd.s32 %v343, %v333
      %v345 = vadd.s32 %v344, %v335
      %v346 = vand.u32 %v323, 65535
      %v347 = vshrl.u32 %v323, 16
      %v348 = vand.u32 %v318, 65535
      %v349 = vshrl.u32 %v318, 16
      %v350 = vmul.u32 %v346, %v348
      %v351 = vmul.u32 %v346, %v349
      %v352 = vmul.u32 %v347, %v348
      %v353 = vmul.u32 %v347, %v349
      %v354 = vshll.u32 %v351, 16
      %v355 = vshrl.u32 %v351, 16
      %v356 = vshll.u32 %v352, 16
      %v357 = vshrl.u32 %v352, 16
      %vm358 = vc.u32 %v350, %v354
      %v359 = vsel %vm358, 1, 0
      %v360 = vadd.s32 %v350, %v354
      %v361 = vadd.s32 %v353, %v359
      %vm362 = vc.u32 %v360, %v356
      %v363 = vsel %vm362, 1, 0
      %v364 = vadd.s32 %v360, %v356
      %v365 = vadd.s32 %v361, %v363
      %v366 = vadd.s32 %v365, %v355
      %v367 = vadd.s32 %v366, %v357
      %v368 = vmul.u32 %v323, %v314
      %v369 = vadd.s32 %v345, %v364
      %vm370 = vc.u32 %v345, %v364
      %v371 = vadd.s32 %v367, 1
      %v372 = vsel %vm370, %v371, %v367
      %v373 = vadd.s32 %v368, %v372
      %v374 = vadd.s32 %v373, 536870912
      %v375 = vshrl.u32 %v374, 30
      %v376 = vshll.u32 %v375, 30
      %v377 = vsub.s32 %v373, %v376
      %vm378 = vcmp.lt.s32.totalorder %v377, 0
      %v379 = vsub.s32 0, %v377
      %v380 = vsel %vm378, %v379, %v377
      %v381 = vclz %v380
      %v382 = vsub.s32 %v381, 2
      %vm383 = vcmp.gt.s32.totalorder 0, %v382
      %v384 = vsel %vm383, 0, %v382
      %v385 = vsub.s32 32, %v384
      %v386 = vshll.u32 %v377, %v384
      %v387 = vshrl.u32 %v369, %v385
      %v388 = vor.u32 %v386, %v387
      %v389 = vsub.s32 4294967266, %v384
      %v390 = vadd.s32 %v389, 127
      %v391 = vshll.u32 %v390, 23
      %v392 = vor.u32 4788187, %v391
      %v393 = vand.u32 2147483647, %v392
      %v395 = vcvt.s32.f32 %v388
      %v396 = vmul.f32 %v395, %v393
      %v397 = vxor.u32 %v396, 2147483648
      %v398 = vsel %vm277, %v397, %v396
      %v399 = vsub.s32 4, %v375
      %v400 = vsel %vm277, %v399, %v375
      %v401 = vsel %vm276, %v273, %v398
      %v402 = vsel %vm276, 0, %v400
      %v403 = vmul.f32 %v401, %v401
      %v404 = vmul.f32 %v403, -0.001358992
      %v405 = vadd.f32 %v404, 0.041655596
      %v406 = vmul.f32 %v403, %v405
      %v407 = vadd.f32 %v406, -0.4999988
      %v408 = vmul.f32 %v403, %v407
      %v409 = vadd.f32 1.0, %v408
      %v410 = vmul.f32 %v401, %v401
      %v411 = vmul.f32 %v410, -0.00019511016
      %v412 = vadd.f32 %v411, 0.008332121
      %v413 = vmul.f32 %v410, %v412
      %v414 = vadd.f32 %v413, -0.16666654
      %v415 = vmul.f32 %v410, %v414
      %v416 = vadd.f32 %v415, 1.0
      %v417 = vmul.f32 %v416, %v401
      %vm418 = vweird.f32 %v273
      %v419 = vand.u32 %v402, 3
      %vm420 = vcmp.lt.s32.totalorder %v419, 2
      %vm421 = vcmp.eq.s32.totalorder %v419, 0
      %v422 = vxor.u32 %v417, 2147483648
      %v423 = vsel %vm421, %v409, %v422
      %vm424 = vcmp.eq.s32.totalorder %v419, 2
      %v425 = vxor.u32 %v409, 2147483648
      %v426 = vsel %vm424, %v425, %v417
      %v427 = vsel %vm420, %v423, %v426
      %v428 = vsel %vm418, nan, %v427
      %v429 = vand.u32 2147483647, %v274
      %vm430 = vcmp.le.f32.partialorder %v429, 0.7853982
      %vm431 = vcmp.lt.s32.totalorder %v274, 0
      %v432 = vand.u32 %v274, 2139095040
      %v433 = vshrl.u32 %v432, 23
      %v434 = vsub.s32 %v433, 127
      %v435 = vand.u32 2147483647, %v274
      %v436 = vand.u32 %v435, 8388607
      %v437 = vor.u32 %v436, 8388608
      %v438 = vsub.s32 0, %v437
      %v439 = vadd.s32 %v434, 1
      %vm440 = vcmp.gt.s32.totalorder %v439, 0
      %v441 = vsel %vm440, %v439, 0
      %v442 = vshrl.u32 %v441, 5
      %v443 = vand.u32 %v441, 31
      %v444 = vsub.s32 32, %v443
      %v445 = vshrl.u32 683565275, %v444
      %v446 = vshll.u32 683565275, %v443
      %v447 = vshrl.u32 2475754826, %v444
      %v448 = vor.u32 %v446, %v447
      %v449 = vshll.u32 2475754826, %v443
      %v450 = vshrl.u32 2131351028, %v444
      %v451 = vor.u32 %v449, %v450
      %v452 = vshll.u32 2131351028, %v443
      %v453 = vshrl.u32 2102212464, %v444
      %v454 = vor.u32 %v452, %v453
      %v455 = vshll.u32 2102212464, %v443
      %v456 = vshrl.u32 920167782, %v444
      %v457 = vor.u32 %v455, %v456
      %v458 = vshll.u32 920167782, %v443
      %v459 = vshrl.u32 1326507024, %v444
      %v460 = vor.u32 %v458, %v459
      %vm461 = vcmp.lt.s32.totalorder %v442, 1
      %vm462 = vcmp.lt.s32.totalorder %v442, 2
      %vm463 = vcmp.lt.s32.totalorder %v442, 3
      %vm464 = vcmp.lt.s32.totalorder %v442, 4
      %v465 = vsel %vm461, %v445, %v448
      %v466 = vsel %vm464, %v454, 2102212464
      %v467 = vsel %vm463, %v451, %v466
      %v468 = vsel %vm462, %v465, %v467
      %v469 = vsel %vm461, %v448, %v451
      %v470 = vsel %vm464, %v457, 920167782
      %v471 = vsel %vm463, %v454, %v470
      %v472 = vsel %vm462, %v469, %v471
      %v473 = vsel %vm461, %v451, %v454
      %v474 = vsel %vm464, %v460, 1326507024
      %v475 = vsel %vm463, %v457, %v474
      %v476 = vsel %vm462, %v473, %v475
      %v477 = vshll.u32 %v437, 8
      %v478 = vand.u32 %v477, 65535
      %v479 = vshrl.u32 %v477, 16
      %v480 = vand.u32 %v476, 65535
      %v481 = vshrl.u32 %v476, 16
      %v482 = vmul.u32 %v478, %v480
      %v483 = vmul.u32 %v478, %v481
      %v484 = vmul.u32 %v479, %v480
      %v485 = vmul.u32 %v479, %v481
      %v486 = vshll.u32 %v483, 16
      %v487 = vshrl.u32 %v483, 16
      %v488 = vshll.u32 %v484, 16
      %v489 = vshrl.u32 %v484, 16
      %vm490 = vc.u32 %v482, %v486
      %v491 = vsel %vm490, 1, 0
      %v492 = vadd.s32 %v482, %v486
      %v493 = vadd.s32 %v485, %v491
      %vm494 = vc.u32 %v492, %v488
      %v495 = vsel %vm494, 1, 0
      %v496 = vadd.s32 %v492, %v488
      %v497 = vadd.s32 %v493, %v495
      %v498 = vadd.s32 %v497, %v487
      %v499 = vadd.s32 %v498, %v489
      %v500 = vand.u32 %v477, 65535
      %v501 = vshrl.u32 %v477, 16
      %v502 = vand.u32 %v472, 65535
      %v503 = vshrl.u32 %v472, 16
      %v504 = vmul.u32 %v500, %v502
      %v505 = vmul.u32 %v500, %v503
      %v506 = vmul.u32 %v501, %v502
      %v507 = vmul.u32 %v501, %v503
      %v508 = vshll.u32 %v505, 16
      %v509 = vshrl.u32 %v505, 16
      %v510 = vshll.u32 %v506, 16
      %v511 = vshrl.u32 %v506, 16
      %vm512 = vc.u32 %v504, %v508
      %v513 = vsel %vm512, 1, 0
      %v514 = vadd.s32 %v504, %v508
      %v515 = vadd.s32 %v507, %v513
      %vm516 = vc.u32 %v514, %v510
      %v517 = vsel %vm516, 1, 0
      %v518 = vadd.s32 %v514, %v510
      %v519 = vadd.s32 %v515, %v517
      %v520 = vadd.s32 %v519, %v509
      %v521 = vadd.s32 %v520, %v511
      %v522 = vmul.u32 %v477, %v468
      %v523 = vadd.s32 %v499, %v518
      %vm524 = vc.u32 %v499, %v518
      %v525 = vadd.s32 %v521, 1
      %v526 = vsel %vm524, %v525, %v521
      %v527 = vadd.s32 %v522, %v526
      %v528 = vadd.s32 %v527, 536870912
      %v529 = vshrl.u32 %v528, 30
      %v530 = vshll.u32 %v529, 30
      %v531 = vsub.s32 %v527, %v530
      %vm532 = vcmp.lt.s32.totalorder %v531, 0
      %v533 = vsub.s32 0, %v531
      %v534 = vsel %vm532, %v533, %v531
      %v535 = vclz %v534
      %v536 = vsub.s32 %v535, 2
      %vm537 = vcmp.gt.s32.totalorder 0, %v536
      %v538 = vsel %vm537, 0, %v536
      %v539 = vsub.s32 32, %v538
      %v540 = vshll.u32 %v531, %v538
      %v541 = vshrl.u32 %v523, %v539
      %v542 = vor.u32 %v540, %v541
      %v543 = vsub.s32 4294967266, %v538
      %v544 = vadd.s32 %v543, 127
      %v545 = vshll.u32 %v544, 23
      %v546 = vor.u32 4788187, %v545
      %v547 = vand.u32 2147483647, %v546
      %v549 = vcvt.s32.f32 %v542
      %v550 = vmul.f32 %v549, %v547
      %v551 = vxor.u32 %v550, 2147483648
      %v552 = vsel %vm431, %v551, %v550
      %v553 = vsub.s32 4, %v529
      %v554 = vsel %vm431, %v553, %v529
      %v555 = vsel %vm430, %v274, %v552
      %v556 = vsel %vm430, 0, %v554
      %v557 = vmul.f32 %v555, %v555
      %v558 = vmul.f32 %v557, -0.001358992
      %v559 = vadd.f32 %v558, 0.041655596
      %v560 = vmul.f32 %v557, %v559
      %v561 = vadd.f32 %v560, -0.4999988
      %v562 = vmul.f32 %v557, %v561
      %v563 = vadd.f32 1.0, %v562
      %v564 = vmul.f32 %v555, %v555
      %v565 = vmul.f32 %v564, -0.00019511016
      %v566 = vadd.f32 %v565, 0.008332121
      %v567 = vmul.f32 %v564, %v566
      %v568 = vadd.f32 %v567, -0.16666654
      %v569 = vmul.f32 %v564, %v568
      %v570 = vadd.f32 %v569, 1.0
      %v571 = vmul.f32 %v570, %v555
      %vm572 = vweird.f32 %v274
      %v573 = vand.u32 %v556, 3
      %vm574 = vcmp.lt.s32.totalorder %v573, 2
      %vm575 = vcmp.eq.s32.totalorder %v573, 0
      %v576 = vxor.u32 %v571, 2147483648
      %v577 = vsel %vm575, %v563, %v576
      %vm578 = vcmp.eq.s32.totalorder %v573, 2
      %v579 = vxor.u32 %v563, 2147483648
      %v580 = vsel %vm578, %v579, %v571
      %v581 = vsel %vm574, %v577, %v580
      %v582 = vsel %vm572, nan, %v581
      %v583 = vand.u32 2147483647, %v273
      %vm584 = vcmp.le.f32.partialorder %v583, 0.7853982
      %vm585 = vcmp.lt.s32.totalorder %v273, 0
      %v586 = vand.u32 %v273, 2139095040
      %v587 = vshrl.u32 %v586, 23
      %v588 = vsub.s32 %v587, 127
      %v589 = vand.u32 2147483647, %v273
      %v590 = vand.u32 %v589, 8388607
      %v591 = vor.u32 %v590, 8388608
      %v592 = vsub.s32 0, %v591
      %v593 = vadd.s32 %v588, 1
      %vm594 = vcmp.gt.s32.totalorder %v593, 0
      %v595 = vsel %vm594, %v593, 0
      %v596 = vshrl.u32 %v595, 5
      %v597 = vand.u32 %v595, 31
      %v598 = vsub.s32 32, %v597
      %v599 = vshrl.u32 683565275, %v598
      %v600 = vshll.u32 683565275, %v597
      %v601 = vshrl.u32 2475754826, %v598
      %v602 = vor.u32 %v600, %v601
      %v603 = vshll.u32 2475754826, %v597
      %v604 = vshrl.u32 2131351028, %v598
      %v605 = vor.u32 %v603, %v604
      %v606 = vshll.u32 2131351028, %v597
      %v607 = vshrl.u32 2102212464, %v598
      %v608 = vor.u32 %v606, %v607
      %v609 = vshll.u32 2102212464, %v597
      %v610 = vshrl.u32 920167782, %v598
      %v611 = vor.u32 %v609, %v610
      %v612 = vshll.u32 920167782, %v597
      %v613 = vshrl.u32 1326507024, %v598
      %v614 = vor.u32 %v612, %v613
      %vm615 = vcmp.lt.s32.totalorder %v596, 1
      %vm616 = vcmp.lt.s32.totalorder %v596, 2
      %vm617 = vcmp.lt.s32.totalorder %v596, 3
      %vm618 = vcmp.lt.s32.totalorder %v596, 4
      %v619 = vsel %vm615, %v599, %v602
      %v620 = vsel %vm618, %v608, 2102212464
      %v621 = vsel %vm617, %v605, %v620
      %v622 = vsel %vm616, %v619, %v621
      %v623 = vsel %vm615, %v602, %v605
      %v624 = vsel %vm618, %v611, 920167782
      %v625 = vsel %vm617, %v608, %v624
      %v626 = vsel %vm616, %v623, %v625
      %v627 = vsel %vm615, %v605, %v608
      %v628 = vsel %vm618, %v614, 1326507024
      %v629 = vsel %vm617, %v611, %v628
      %v630 = vsel %vm616, %v627, %v629
      %v631 = vshll.u32 %v591, 8
      %v632 = vand.u32 %v631, 65535
      %v633 = vshrl.u32 %v631, 16
      %v634 = vand.u32 %v630, 65535
      %v635 = vshrl.u32 %v630, 16
      %v636 = vmul.u32 %v632, %v634
      %v637 = vmul.u32 %v632, %v635
      %v638 = vmul.u32 %v633, %v634
      %v639 = vmul.u32 %v633, %v635
      %v640 = vshll.u32 %v637, 16
      %v641 = vshrl.u32 %v637, 16
      %v642 = vshll.u32 %v638, 16
      %v643 = vshrl.u32 %v638, 16
      %vm644 = vc.u32 %v636, %v640
      %v645 = vsel %vm644, 1, 0
      %v646 = vadd.s32 %v636, %v640
      %v647 = vadd.s32 %v639, %v645
      %vm648 = vc.u32 %v646, %v642
      %v649 = vsel %vm648, 1, 0
      %v650 = vadd.s32 %v646, %v642
      %v651 = vadd.s32 %v647, %v649
      %v652 = vadd.s32 %v651, %v641
      %v653 = vadd.s32 %v652, %v643
      %v654 = vand.u32 %v631, 65535
      %v655 = vshrl.u32 %v631, 16
      %v656 = vand.u32 %v626, 65535
      %v657 = vshrl.u32 %v626, 16
      %v658 = vmul.u32 %v654, %v656
      %v659 = vmul.u32 %v654, %v657
      %v660 = vmul.u32 %v655, %v656
      %v661 = vmul.u32 %v655, %v657
      %v662 = vshll.u32 %v659, 16
      %v663 = vshrl.u32 %v659, 16
      %v664 = vshll.u32 %v660, 16
      %v665 = vshrl.u32 %v660, 16
      %vm666 = vc.u32 %v658, %v662
      %v667 = vsel %vm666, 1, 0
      %v668 = vadd.s32 %v658, %v662
      %v669 = vadd.s32 %v661, %v667
      %vm670 = vc.u32 %v668, %v664
      %v671 = vsel %vm670, 1, 0
      %v672 = vadd.s32 %v668, %v664
      %v673 = vadd.s32 %v669, %v671
      %v674 = vadd.s32 %v673, %v663
      %v675 = vadd.s32 %v674, %v665
      %v676 = vmul.u32 %v631, %v622
      %v677 = vadd.s32 %v653, %v672
      %vm678 = vc.u32 %v653, %v672
      %v679 = vadd.s32 %v675, 1
      %v680 = vsel %vm678, %v679, %v675
      %v681 = vadd.s32 %v676, %v680
      %v682 = vadd.s32 %v681, 536870912
      %v683 = vshrl.u32 %v682, 30
      %v684 = vshll.u32 %v683, 30
      %v685 = vsub.s32 %v681, %v684
      %vm686 = vcmp.lt.s32.totalorder %v685, 0
      %v687 = vsub.s32 0, %v685
      %v688 = vsel %vm686, %v687, %v685
      %v689 = vclz %v688
      %v690 = vsub.s32 %v689, 2
      %vm691 = vcmp.gt.s32.totalorder 0, %v690
      %v692 = vsel %vm691, 0, %v690
      %v693 = vsub.s32 32, %v692
      %v694 = vshll.u32 %v685, %v692
      %v695 = vshrl.u32 %v677, %v693
      %v696 = vor.u32 %v694, %v695
      %v697 = vsub.s32 4294967266, %v692
      %v698 = vadd.s32 %v697, 127
      %v699 = vshll.u32 %v698, 23
      %v700 = vor.u32 4788187, %v699
      %v701 = vand.u32 2147483647, %v700
      %v703 = vcvt.s32.f32 %v696
      %v704 = vmul.f32 %v703, %v701
      %v705 = vxor.u32 %v704, 2147483648
      %v706 = vsel %vm585, %v705, %v704
      %v707 = vsub.s32 4, %v683
      %v708 = vsel %vm585, %v707, %v683
      %v709 = vsel %vm584, %v273, %v706
      %v710 = vsel %vm584, 0, %v708
      %v711 = vmul.f32 %v709, %v709
      %v712 = vmul.f32 %v711, -0.001358992
      %v713 = vadd.f32 %v712, 0.041655596
      %v714 = vmul.f32 %v711, %v713
      %v715 = vadd.f32 %v714, -0.4999988
      %v716 = vmul.f32 %v711, %v715
      %v717 = vadd.f32 1.0, %v716
      %v718 = vmul.f32 %v709, %v709
      %v719 = vmul.f32 %v718, -0.00019511016
      %v720 = vadd.f32 %v719, 0.008332121
      %v721 = vmul.f32 %v718, %v720
      %v722 = vadd.f32 %v721, -0.16666654
      %v723 = vmul.f32 %v718, %v722
      %v724 = vadd.f32 %v723, 1.0
      %v725 = vmul.f32 %v724, %v709
      %vm726 = vweird.f32 %v273
      %v727 = vadd.s32 %v710, 3
      %v728 = vand.u32 %v727, 3
      %vm729 = vcmp.lt.s32.totalorder %v728, 2
      %vm730 = vcmp.eq.s32.totalorder %v728, 0
      %v731 = vxor.u32 %v725, 2147483648
      %v732 = vsel %vm730, %v717, %v731
      %vm733 = vcmp.eq.s32.totalorder %v728, 2
      %v734 = vxor.u32 %v717, 2147483648
      %v735 = vsel %vm733, %v734, %v725
      %v736 = vsel %vm729, %v732, %v735
      %v737 = vsel %vm726, nan, %v736
      %v738 = vand.u32 2147483647, %v274
      %vm739 = vcmp.le.f32.partialorder %v738, 0.7853982
      %vm740 = vcmp.lt.s32.totalorder %v274, 0
      %v741 = vand.u32 %v274, 2139095040
      %v742 = vshrl.u32 %v741, 23
      %v743 = vsub.s32 %v742, 127
      %v744 = vand.u32 2147483647, %v274
      %v745 = vand.u32 %v744, 8388607
      %v746 = vor.u32 %v745, 8388608
      %v747 = vsub.s32 0, %v746
      %v748 = vadd.s32 %v743, 1
      %vm749 = vcmp.gt.s32.totalorder %v748, 0
      %v750 = vsel %vm749, %v748, 0
      %v751 = vshrl.u32 %v750, 5
      %v752 = vand.u32 %v750, 31
      %v753 = vsub.s32 32, %v752
      %v754 = vshrl.u32 683565275, %v753
      %v755 = vshll.u32 683565275, %v752
      %v756 = vshrl.u32 2475754826, %v753
      %v757 = vor.u32 %v755, %v756
      %v758 = vshll.u32 2475754826, %v752
      %v759 = vshrl.u32 2131351028, %v753
      %v760 = vor.u32 %v758, %v759
      %v761 = vshll.u32 2131351028, %v752
      %v762 = vshrl.u32 2102212464, %v753
      %v763 = vor.u32 %v761, %v762
      %v764 = vshll.u32 2102212464, %v752
      %v765 = vshrl.u32 920167782, %v753
      %v766 = vor.u32 %v764, %v765
      %v767 = vshll.u32 920167782, %v752
      %v768 = vshrl.u32 1326507024, %v753
      %v769 = vor.u32 %v767, %v768
      %vm770 = vcmp.lt.s32.totalorder %v751, 1
      %vm771 = vcmp.lt.s32.totalorder %v751, 2
      %vm772 = vcmp.lt.s32.totalorder %v751, 3
      %vm773 = vcmp.lt.s32.totalorder %v751, 4
      %v774 = vsel %vm770, %v754, %v757
      %v775 = vsel %vm773, %v763, 2102212464
      %v776 = vsel %vm772, %v760, %v775
      %v777 = vsel %vm771, %v774, %v776
      %v778 = vsel %vm770, %v757, %v760
      %v779 = vsel %vm773, %v766, 920167782
      %v780 = vsel %vm772, %v763, %v779
      %v781 = vsel %vm771, %v778, %v780
      %v782 = vsel %vm770, %v760, %v763
      %v783 = vsel %vm773, %v769, 1326507024
      %v784 = vsel %vm772, %v766, %v783
      %v785 = vsel %vm771, %v782, %v784
      %v786 = vshll.u32 %v746, 8
      %v787 = vand.u32 %v786, 65535
      %v788 = vshrl.u32 %v786, 16
      %v789 = vand.u32 %v785, 65535
      %v790 = vshrl.u32 %v785, 16
      %v791 = vmul.u32 %v787, %v789
      %v792 = vmul.u32 %v787, %v790
      %v793 = vmul.u32 %v788, %v789
      %v794 = vmul.u32 %v788, %v790
      %v795 = vshll.u32 %v792, 16
      %v796 = vshrl.u32 %v792, 16
      %v797 = vshll.u32 %v793, 16
      %v798 = vshrl.u32 %v793, 16
      %vm799 = vc.u32 %v791, %v795
      %v800 = vsel %vm799, 1, 0
      %v801 = vadd.s32 %v791, %v795
      %v802 = vadd.s32 %v794, %v800
      %vm803 = vc.u32 %v801, %v797
      %v804 = vsel %vm803, 1, 0
      %v805 = vadd.s32 %v801, %v797
      %v806 = vadd.s32 %v802, %v804
      %v807 = vadd.s32 %v806, %v796
      %v808 = vadd.s32 %v807, %v798
      %v809 = vand.u32 %v786, 65535
      %v810 = vshrl.u32 %v786, 16
      %v811 = vand.u32 %v781, 65535
      %v812 = vshrl.u32 %v781, 16
      %v813 = vmul.u32 %v809, %v811
      %v814 = vmul.u32 %v809, %v812
      %v815 = vmul.u32 %v810, %v811
      %v816 = vmul.u32 %v810, %v812
      %v817 = vshll.u32 %v814, 16
      %v818 = vshrl.u32 %v814, 16
      %v819 = vshll.u32 %v815, 16
      %v820 = vshrl.u32 %v815, 16
      %vm821 = vc.u32 %v813, %v817
      %v822 = vsel %vm821, 1, 0
      %v823 = vadd.s32 %v813, %v817
      %v824 = vadd.s32 %v816, %v822
      %vm825 = vc.u32 %v823, %v819
      %v826 = vsel %vm825, 1, 0
      %v827 = vadd.s32 %v823, %v819
      %v828 = vadd.s32 %v824, %v826
      %v829 = vadd.s32 %v828, %v818
      %v830 = vadd.s32 %v829, %v820
      %v831 = vmul.u32 %v786, %v777
      %v832 = vadd.s32 %v808, %v827
      %vm833 = vc.u32 %v808, %v827
      %v834 = vadd.s32 %v830, 1
      %v835 = vsel %vm833, %v834, %v830
      %v836 = vadd.s32 %v831, %v835
      %v837 = vadd.s32 %v836, 536870912
      %v838 = vshrl.u32 %v837, 30
      %v839 = vshll.u32 %v838, 30
      %v840 = vsub.s32 %v836, %v839
      %vm841 = vcmp.lt.s32.totalorder %v840, 0
      %v842 = vsub.s32 0, %v840
      %v843 = vsel %vm841, %v842, %v840
      %v844 = vclz %v843
      %v845 = vsub.s32 %v844, 2
      %vm846 = vcmp.gt.s32.totalorder 0, %v845
      %v847 = vsel %vm846, 0, %v845
      %v848 = vsub.s32 32, %v847
      %v849 = vshll.u32 %v840, %v847
      %v850 = vshrl.u32 %v832, %v848
      %v851 = vor.u32 %v849, %v850
      %v852 = vsub.s32 4294967266, %v847
      %v853 = vadd.s32 %v852, 127
      %v854 = vshll.u32 %v853, 23
      %v855 = vor.u32 4788187, %v854
      %v856 = vand.u32 2147483647, %v855
      %v858 = vcvt.s32.f32 %v851
      %v859 = vmul.f32 %v858, %v856
      %v860 = vxor.u32 %v859, 2147483648
      %v861 = vsel %vm740, %v860, %v859
      %v862 = vsub.s32 4, %v838
      %v863 = vsel %vm740, %v862, %v838
      %v864 = vsel %vm739, %v274, %v861
      %v865 = vsel %vm739, 0, %v863
      %v866 = vmul.f32 %v864, %v864
      %v867 = vmul.f32 %v866, -0.001358992
      %v868 = vadd.f32 %v867, 0.041655596
      %v869 = vmul.f32 %v866, %v868
      %v870 = vadd.f32 %v869, -0.4999988
      %v871 = vmul.f32 %v866, %v870
      %v872 = vadd.f32 1.0, %v871
      %v873 = vmul.f32 %v864, %v864
      %v874 = vmul.f32 %v873, -0.00019511016
      %v875 = vadd.f32 %v874, 0.008332121
      %v876 = vmul.f32 %v873, %v875
      %v877 = vadd.f32 %v876, -0.16666654
      %v878 = vmul.f32 %v873, %v877
      %v879 = vadd.f32 %v878, 1.0
      %v880 = vmul.f32 %v879, %v864
      %vm881 = vweird.f32 %v274
      %v882 = vadd.s32 %v865, 3
      %v883 = vand.u32 %v882, 3
      %vm884 = vcmp.lt.s32.totalorder %v883, 2
      %vm885 = vcmp.eq.s32.totalorder %v883, 0
      %v886 = vxor.u32 %v880, 2147483648
      %v887 = vsel %vm885, %v872, %v886
      %vm888 = vcmp.eq.s32.totalorder %v883, 2
      %v889 = vxor.u32 %v872, 2147483648
      %v890 = vsel %vm888, %v889, %v880
      %v891 = vsel %vm884, %v887, %v890
      %v892 = vsel %vm881, nan, %v891
      %v893 = vpack.c.bf16 %v582, %v428
      %v894 = vld [vmem:[%s2] sm:$0xf]
      %v895 = vld [vmem:[%s2 + $0x4] sm:$0xf]
      %v896 = vld [vmem:[%s2 + $0x8] sm:$0xf]
      %v897 = vld [vmem:[%s2 + $0xc] sm:$0xf]
      %v898 = vld [vmem:[%s2 + $0x10] sm:$0xf]
      %v899 = vpack.c.bf16 %v892, %v737
      %v900 = vld [vmem:[%s3] sm:$0xf]
      %v901 = vld [vmem:[%s3 + $0x4] sm:$0xf]
      %v902 = vld [vmem:[%s3 + $0x8] sm:$0xf]
      %v903 = vld [vmem:[%s3 + $0xc] sm:$0xf]
      %v904 = vld [vmem:[%s3 + $0x10] sm:$0xf]
      %v910 = vunpack.c.l.b16 %v900
      %v911 = vunpack.c.l.b16 %v901
      %v912 = vunpack.c.l.b16 %v902
      %v913 = vunpack.c.l.b16 %v903
      %v914 = vunpack.c.l.b16 %v904
      %v915 = vpack.c.b16 %v911, %v910
      %v916 = vpack.c.b16 %v913, %v912
      %v917 = vpack.c.b16 %v914, %v914
      %vm920 = vcmask 326656
      %v922 = vsel %vm920, %v899, 0
      %vm924 = vcmask 1043456
      %v926 = vsel %vm924, %v917, 0
      %928 = vmatpush.bf16.msra.mxu0 0
      %929 = vmatpush.bf16.msra.mxu0 0
      %930 = vmatpush.bf16.msra.mxu0 0
      %931 = vmatpush.bf16.msra.mxu0 0
      %932 = vmatpush.bf16.msra.mxu0 0
      %933 = vmatpush.bf16.msra.mxu0 %v926
      %934 = vmatpush.bf16.msra.mxu0 %v916
      %935 = vmatpush.bf16.msra.mxu0 %v915
      %936 = vmatmul.bf16.gmra.mxu0 %v922
      %v937 = vpop.f32.mrf.mxu0
      %v938 = vadd.f32 0.0, %v937
      %v939 = vpop.f32.mrf.mxu0
      %v940 = vadd.f32 0.0, %v939
      %941 = vdwg.mxu0
      %v947 = vunpack.c.l.b16 %v894
      %v948 = vunpack.c.l.b16 %v895
      %v949 = vunpack.c.l.b16 %v896
      %v950 = vunpack.c.l.b16 %v897
      %v951 = vunpack.c.l.b16 %v898
      %v952 = vpack.c.b16 %v948, %v947
      %v953 = vpack.c.b16 %v950, %v949
      %v954 = vpack.c.b16 %v951, %v951
      %v958 = vsel %vm920, %v893, 0
      %v961 = vsel %vm924, %v954, 0
      %963 = vmatpush.bf16.msra.mxu0 0
      %964 = vmatpush.bf16.msra.mxu0 0
      %965 = vmatpush.bf16.msra.mxu0 0
      %966 = vmatpush.bf16.msra.mxu0 0
      %967 = vmatpush.bf16.msra.mxu0 0
      %968 = vmatpush.bf16.msra.mxu0 %v961
      %969 = vmatpush.bf16.msra.mxu0 %v953
      %970 = vmatpush.bf16.msra.mxu0 %v952
      %971 = vmatmul.bf16.gmra.mxu0 %v958
      %v972 = vpop.f32.mrf.mxu0
      %v973 = vadd.f32 %v938, %v972
      %v974 = vpop.f32.mrf.mxu0
      %v975 = vadd.f32 %v940, %v974
      %976 = vdwg.mxu0
      %v977 = vld [vmem:[%s4] sm:$0x1]
      %v979 = vperm.slane %v977, 0
      %v981 = vadd.f32 %v973, %v979
      %v982 = vadd.f32 %v975, %v979
      %983 = vst.msk [vmem:[%s226] sm:$0xff] %vm260, %v981
      %984 = vst.msk [vmem:[%s226 + $0x8] sm:$0xff] %vm260, %v982
      %s985 = smul.u32 2, %s16
      %p986 = scmp.lt.s32.totalorder %s985, 3
      %s987 = scalar_select %p986, %s985, 3
      %s988 = smul.addr %s987, 8
      %s989 = scalar_lea.vmem %s5, %s988
      // Predicated region
      $region41: #{fourier_kan_forward.1} parent=39 // pred_check
        %p990 = pneg %p144
      $region42: #{fourier_kan_forward.1} parent=39 // pred_check_branch
        %992 = sbr.rel (%p990) target = $region44
      $region43: #{fourier_kan_forward.1} parent=39 // pred_region
        %s993 = smul.u32 2, %s16
      $region44: #{fourier_kan_forward.1} parent=39 // pred_fallthru
        _
    $region40: #{fourier_kan_forward.1} parent=5 // pred_fallthru
      _
    %p994 = scmp.le.s32.totalorder 2, %s11
    // Predicated region
    $region45: #{fourier_kan_forward.1} parent=5 // pred_check
      %p995 = pneg %p994
    $region46: #{fourier_kan_forward.1} parent=5 // pred_check_branch
      %997 = sbr.rel (%p995) target = $region48
    $region47: #{fourier_kan_forward.1} parent=5 // pred_region
      %s998 = ssub.s32 %s11, 2
      // Predicated region
      $region49: #{fourier_kan_forward.1} parent=47 // pred_check
        %p999 = pneg %p150
      $region50: #{fourier_kan_forward.1} parent=47 // pred_check_branch
        %1001 = sbr.rel (%p999) target = $region52
      $region51: #{fourier_kan_forward.1} parent=47 // pred_region
        %s1002 = smul.u32 2, %s17
        %p1003 = scmp.lt.s32.totalorder %s1002, 3
        %s1004 = scalar_select %p1003, %s1002, 3
        %s1005 = smul.addr %s1004, 8
        %s1006 = scalar_lea.vmem %s5, %s1005
      $region52: #{fourier_kan_forward.1} parent=47 // pred_fallthru
        _
    $region48: #{fourier_kan_forward.1} parent=5 // pred_fallthru
      _
  $region6: #{fourier_kan_forward.1} parent=0 // loop_footer
    %s15 = sadd.s32 1, %s11
  $region7: #{fourier_kan_forward.1} parent=0 // loop_footer_branch
    %10 = sbr.rel target = $region3
  $region8: #{fourier_kan_forward.1} parent=0 // loop_exit
    _

</llo_original>
